<compile_context>
chip_gen: v6e
topology: v6e:2x2x1
jax: 0.10.0
libtpu: 0.0.40
codegen_flags: <defaults>
</compile_context>

<pallas_src>
import jax
import jax.numpy as jnp
from jax.experimental import pallas as pl
from jax.experimental.pallas import tpu as pltpu

_LANES = 128
_SUBLANES = 16  # bf16 sublane packing


def _round_up(n, m):
    return ((n + m - 1) // m) * m


def _pad2d(a, rows, cols):
    r, c = a.shape
    return jnp.pad(a, ((0, rows - r), (0, cols - c)))


def _mlp_kernel(x_ref, w1_ref, b1_ref, w2_ref, b2_ref, w3_ref, b3_ref, o_ref):
    # Layer 1: Linear (bf16 operands on the MXU, f32 accumulation) + bias + ReLU.
    h1 = jnp.dot(x_ref[...], w1_ref[...], preferred_element_type=jnp.float32)
    h1 = jnp.maximum(h1 + b1_ref[...], 0.0)
    # TODO(synk): Dropout(p=0.5) is identity at inference; training-mode dropout
    # (pltpu.prng_random_bits mask + 1/(1-p) scale) intentionally omitted.

    # Layer 2: one downcast to bf16 for the MXU, accumulate in f32.
    h2 = jnp.dot(h1.astype(jnp.bfloat16), w2_ref[...],
                 preferred_element_type=jnp.float32)
    h2 = jnp.maximum(h2 + b2_ref[...], 0.0)

    # Layer 3: logits, kept in f32 (lane-dense store: Op is a multiple of 128).
    out = jnp.dot(h2.astype(jnp.bfloat16), w3_ref[...],
                  preferred_element_type=jnp.float32)
    o_ref[...] = (out + b3_ref[...]).astype(o_ref.dtype)


def prepare_params(params):
    """One-time pad/cast of the weights (hoisted out of the per-call path).

    Only the MXU N dims / output lanes (H1, H2, O) are zero-padded to multiples
    of 128; the contraction dims stay at their real sizes (the MXU pads K
    internally for free). Weights -> bf16, biases stay f32. Padding is exact:
    ReLU(0) = 0 and zero rows/cols contribute nothing.
    """
    D, H1 = params["w1"].shape
    H2 = params["w2"].shape[1]
    O = params["w3"].shape[1]
    H1p, H2p, Op = (_round_up(d, _LANES) for d in (H1, H2, O))
    return dict(
        w1=_pad2d(params["w1"], D, H1p).astype(jnp.bfloat16),
        b1=_pad2d(params["b1"], 1, H1p).astype(jnp.float32),
        w2=_pad2d(params["w2"], H1p, H2p).astype(jnp.bfloat16),
        b2=_pad2d(params["b2"], 1, H2p).astype(jnp.float32),
        w3=_pad2d(params["w3"], H2p, Op).astype(jnp.bfloat16),
        b3=_pad2d(params["b3"], 1, Op).astype(jnp.float32),
        dims=(D, H1, H2, O),
    )


def _resident_spec(shape):
    """BlockSpec for a grid-invariant operand: constant index_map, single buffer."""
    try:
        return pl.BlockSpec(shape, lambda i: (0, 0), pipeline_mode=pl.Buffered(1))
    except (TypeError, AttributeError):
        # Older jax without pipeline_mode/Buffered: fall back to default buffering.
        return pl.BlockSpec(shape, lambda i: (0, 0))


def _choose_batch_tile(B, max_tile, min_grid_steps):
    """Pick a batch tile: multiple of 16, <= max_tile, with enough grid steps to
    pipeline DMAs and keep both v7x TensorCores busy, without padding B by much."""
    B16 = _round_up(B, _SUBLANES)
    tb = min(_round_up(max_tile, _SUBLANES), B16)
    while tb > _SUBLANES and pl.cdiv(B16, tb) < min_grid_steps:
        tb = max(_SUBLANES, _round_up(tb // 2, _SUBLANES))
    Bp = _round_up(B, tb)
    return tb, Bp


def mlp_classifier_forward(x, prepared, *, batch_tile=512, min_grid_steps=4):
    """Fused 3-layer MLP forward.

    x: [B, input_dim] float32
    prepared: output of prepare_params() (padded bf16 weights, f32 biases).
    Returns [B, output_dim] float32 logits.
    """
    B, D = x.shape
    Dw, H1, H2, O = prepared["dims"]
    assert D == Dw, (D, Dw)
    H1p = prepared["w1"].shape[1]
    H2p = prepared["w2"].shape[1]
    Op = prepared["w3"].shape[1]

    tb, Bp = _choose_batch_tile(B, batch_tile, min_grid_steps)
    grid = (Bp // tb,)

    # Only the batch dim of x is padded (to a multiple of tb); D stays unpadded
    # since the x block's last dim equals the full array dim.
    xp = _pad2d(x, Bp, D).astype(jnp.bfloat16)

    # Scheduler hint.
    flops = 2 * Bp * (D * H1p + H1p * H2p + H2p * Op)
    bytes_accessed = (xp.size + prepared["w1"].size + prepared["w2"].size
                      + prepared["w3"].size) * 2 \
        + (prepared["b1"].size + prepared["b2"].size + prepared["b3"].size) * 4 \
        + Bp * Op * 4

    # VMEM budget: single-buffered resident weights/biases + double-buffered
    # x/out tiles + f32 intermediates, 2x headroom, capped generation-aware.
    weights_bytes = (prepared["w1"].size + prepared["w2"].size
                     + prepared["w3"].size) * 2 \
        + (prepared["b1"].size + prepared["b2"].size + prepared["b3"].size) * 4
    pipeline_bytes = 2 * tb * D * 2 + 2 * tb * Op * 4
    interm_bytes = tb * (H1p + H2p) * 4
    vmem_need = weights_bytes + pipeline_bytes + interm_bytes
    try:
        vmem_cap = int(pltpu.get_tpu_info().vmem_capacity_bytes)
    except Exception:
        vmem_cap = 64 * 1024 * 1024  # v7x per-TC VMEM (smallest current gen)
    vmem_limit = int(min(max(2 * vmem_need, 8 * 1024 * 1024),
                         (vmem_cap * 7) // 8))

    out = pl.pallas_call(
        _mlp_kernel,
        out_shape=jax.ShapeDtypeStruct((Bp, Op), jnp.float32),
        grid_spec=pltpu.PrefetchScalarGridSpec(
            num_scalar_prefetch=0,
            grid=grid,
            in_specs=[
                pl.BlockSpec((tb, D), lambda i: (i, 0)),  # x tile (pipelined)
                _resident_spec((D, H1p)),    # w1
                _resident_spec((1, H1p)),    # b1
                _resident_spec((H1p, H2p)),  # w2
                _resident_spec((1, H2p)),    # b2
                _resident_spec((H2p, Op)),   # w3
                _resident_spec((1, Op)),     # b3
            ],
            out_specs=pl.BlockSpec((tb, Op), lambda i: (i, 0)),
        ),
        compiler_params=pltpu.CompilerParams(
            dimension_semantics=("parallel",),
            vmem_limit_bytes=vmem_limit),
        cost_estimate=pl.CostEstimate(
            flops=int(flops), transcendentals=0,
            bytes_accessed=int(bytes_accessed)),
    )(xp, prepared["w1"], prepared["b1"], prepared["w2"], prepared["b2"],
      prepared["w3"], prepared["b3"])

    return out[:B, :O]


def init_params(key, input_dim, hidden_dim1, hidden_dim2, output_dim):
    """Deterministic init mirroring torch.nn.Linear's U(-1/sqrt(fan_in), +)."""
    def linear_init(k, fan_in, fan_out):
        kw, kb = jax.random.split(k)
        bound = 1.0 / jnp.sqrt(fan_in)
        # stored as [in, out] (i.e. torch weight transposed)
        w = jax.random.uniform(kw, (fan_in, fan_out), jnp.float32, -bound, bound)
        b = jax.random.uniform(kb, (1, fan_out), jnp.float32, -bound, bound)
        return w, b

    k1, k2, k3 = jax.random.split(key, 3)
    w1, b1 = linear_init(k1, input_dim, hidden_dim1)
    w2, b2 = linear_init(k2, hidden_dim1, hidden_dim2)
    w3, b3 = linear_init(k3, hidden_dim2, output_dim)
    return dict(w1=w1, b1=b1, w2=w2, b2=b2, w3=w3, b3=b3)


def _reference(x, p):
    """Matches kernel numerics: bf16 operands, f32 accumulation, f32 bias add."""
    bf = jnp.bfloat16
    h1 = jnp.dot(x.astype(bf), p["w1"].astype(bf),
                 preferred_element_type=jnp.float32) + p["b1"]
    h1 = jnp.maximum(h1, 0.0)
    h2 = jnp.dot(h1.astype(bf), p["w2"].astype(bf),
                 preferred_element_type=jnp.float32) + p["b2"]
    h2 = jnp.maximum(h2, 0.0)
    return jnp.dot(h2.astype(bf), p["w3"].astype(bf),
                   preferred_element_type=jnp.float32) + p["b3"]


if __name__ == "__main__":
    key = jax.random.PRNGKey(0)
    kx, kp = jax.random.split(key)

    # B=512 with the tile heuristic -> tb=128, 4-step parallel grid
    # (>= 2 steps per TensorCore on v7x, pipelined on v5e/v6e).
    B, input_dim, hidden1, hidden2, out_dim = 512, 64, 32, 32, 10
    x = jax.random.normal(kx, (B, input_dim), jnp.float32)
    params = init_params(kp, input_dim, hidden1, hidden2, out_dim)

    prepared = prepare_params(params)   # one-time pad/cast, out of the hot path
    y = mlp_classifier_forward(x, prepared)
    y = jax.block_until_ready(y)

    y_ref = _reference(x, params)
    assert y.shape == (B, out_dim)
    assert jnp.allclose(y, y_ref, atol=2e-2, rtol=2e-2), (
        float(jnp.max(jnp.abs(y - y_ref))))

    print("KERNEL_OK")
</pallas_src>

<mosaic_0001>
module attributes {stable_mosaic.version = 11 : i64} {
  func.func @_mlp_kernel(%arg0: i32, %arg1: memref<128x64xbf16, #tpu.memory_space<vmem>>, %arg2: memref<64x128xbf16, #tpu.memory_space<vmem>>, %arg3: memref<1x128xf32, #tpu.memory_space<vmem>>, %arg4: memref<128x128xbf16, #tpu.memory_space<vmem>>, %arg5: memref<1x128xf32, #tpu.memory_space<vmem>>, %arg6: memref<128x128xbf16, #tpu.memory_space<vmem>>, %arg7: memref<1x128xf32, #tpu.memory_space<vmem>>, %arg8: memref<128x128xf32, #tpu.memory_space<vmem>>) attributes {dimension_semantics = [#tpu.dimension_semantics<parallel>], iteration_bounds = array<i64: 4>, scalar_prefetch = 0 : i64, scratch_operands = 0 : i64, tpu.core_type = #tpu.core_type<tc>, window_params = [{transform_indices = @transform_0, window_bounds = array<i64: 128, 64>}, {pipeline_mode = #tpu.pipeline_mode<synchronous>, transform_indices = @transform_1, window_bounds = array<i64: 64, 128>}, {pipeline_mode = #tpu.pipeline_mode<synchronous>, transform_indices = @transform_2, window_bounds = array<i64: 1, 128>}, {pipeline_mode = #tpu.pipeline_mode<synchronous>, transform_indices = @transform_3, window_bounds = array<i64: 128, 128>}, {pipeline_mode = #tpu.pipeline_mode<synchronous>, transform_indices = @transform_4, window_bounds = array<i64: 1, 128>}, {pipeline_mode = #tpu.pipeline_mode<synchronous>, transform_indices = @transform_5, window_bounds = array<i64: 128, 128>}, {pipeline_mode = #tpu.pipeline_mode<synchronous>, transform_indices = @transform_6, window_bounds = array<i64: 1, 128>}, {transform_indices = @transform_7, window_bounds = array<i64: 128, 128>}]} {
    %c0 = arith.constant 0 : index
    %c0_0 = arith.constant 0 : index
    %0 = vector.load %arg1[%c0, %c0_0] : memref<128x64xbf16, #tpu.memory_space<vmem>>, vector<128x64xbf16>
    %c0_1 = arith.constant 0 : index
    %c0_2 = arith.constant 0 : index
    %1 = vector.load %arg2[%c0_1, %c0_2] : memref<64x128xbf16, #tpu.memory_space<vmem>>, vector<64x128xbf16>
    %cst = arith.constant dense<0.000000e+00> : vector<128x128xf32>
    %2 = tpu.matmul %0, %1, %cst {dimension_numbers = #tpu.dot_dimension_numbers<[1], [0], [0], [1], [0, 0, 1, 1], [], []>} : vector<128x64xbf16>, vector<64x128xbf16>, vector<128x128xf32> -> vector<128x128xf32>
    %c0_3 = arith.constant 0 : index
    %c0_4 = arith.constant 0 : index
    %3 = vector.load %arg3[%c0_3, %c0_4] : memref<1x128xf32, #tpu.memory_space<vmem>>, vector<1x128xf32>
    %4 = vector.broadcast %3 : vector<1x128xf32> to vector<128x128xf32>
    %5 = arith.addf %2, %4 : vector<128x128xf32>
    %cst_5 = arith.constant 0.000000e+00 : f32
    %6 = vector.broadcast %cst_5 : f32 to vector<128x128xf32>
    %7 = arith.maximumf %5, %6 : vector<128x128xf32>
    %8 = arith.truncf %7 : vector<128x128xf32> to vector<128x128xbf16>
    %c0_6 = arith.constant 0 : index
    %c0_7 = arith.constant 0 : index
    %9 = vector.load %arg4[%c0_6, %c0_7] : memref<128x128xbf16, #tpu.memory_space<vmem>>, vector<128x128xbf16>
    %cst_8 = arith.constant dense<0.000000e+00> : vector<128x128xf32>
    %10 = tpu.matmul %8, %9, %cst_8 {dimension_numbers = #tpu.dot_dimension_numbers<[1], [0], [0], [1], [0, 0, 1, 1], [], []>} : vector<128x128xbf16>, vector<128x128xbf16>, vector<128x128xf32> -> vector<128x128xf32>
    %c0_9 = arith.constant 0 : index
    %c0_10 = arith.constant 0 : index
    %11 = vector.load %arg5[%c0_9, %c0_10] : memref<1x128xf32, #tpu.memory_space<vmem>>, vector<1x128xf32>
    %12 = vector.broadcast %11 : vector<1x128xf32> to vector<128x128xf32>
    %13 = arith.addf %10, %12 : vector<128x128xf32>
    %cst_11 = arith.constant 0.000000e+00 : f32
    %14 = vector.broadcast %cst_11 : f32 to vector<128x128xf32>
    %15 = arith.maximumf %13, %14 : vector<128x128xf32>
    %16 = arith.truncf %15 : vector<128x128xf32> to vector<128x128xbf16>
    %c0_12 = arith.constant 0 : index
    %c0_13 = arith.constant 0 : index
    %17 = vector.load %arg6[%c0_12, %c0_13] : memref<128x128xbf16, #tpu.memory_space<vmem>>, vector<128x128xbf16>
    %cst_14 = arith.constant dense<0.000000e+00> : vector<128x128xf32>
    %18 = tpu.matmul %16, %17, %cst_14 {dimension_numbers = #tpu.dot_dimension_numbers<[1], [0], [0], [1], [0, 0, 1, 1], [], []>} : vector<128x128xbf16>, vector<128x128xbf16>, vector<128x128xf32> -> vector<128x128xf32>
    %c0_15 = arith.constant 0 : index
    %c0_16 = arith.constant 0 : index
    %19 = vector.load %arg7[%c0_15, %c0_16] : memref<1x128xf32, #tpu.memory_space<vmem>>, vector<1x128xf32>
    %20 = vector.broadcast %19 : vector<1x128xf32> to vector<128x128xf32>
    %21 = arith.addf %18, %20 : vector<128x128xf32>
    %c0_17 = arith.constant 0 : index
    %c0_18 = arith.constant 0 : index
    %22 = vector.load %arg8[%c0_17, %c0_18] : memref<128x128xf32, #tpu.memory_space<vmem>>, vector<128x128xf32>
    tpu.vector_store %arg8[%c0_17, %c0_18], %21 {strides = array<i32>} : memref<128x128xf32, #tpu.memory_space<vmem>>, vector<128x128xf32>,
    return
  }
  func.func @transform_0(%arg0: i32) -> (i32, i32) {
    %c0_i32 = arith.constant 0 : i32
    %c0_i32_0 = arith.constant 0 : i32
    return %arg0, %c0_i32 : i32, i32
  }
  func.func @transform_1(%arg0: i32) -> (i32, i32) {
    %c0_i32 = arith.constant 0 : i32
    %c0_i32_0 = arith.constant 0 : i32
    %c0_i32_1 = arith.constant 0 : i32
    return %c0_i32, %c0_i32_0 : i32, i32
  }
  func.func @transform_2(%arg0: i32) -> (i32, i32) {
    %c0_i32 = arith.constant 0 : i32
    %c0_i32_0 = arith.constant 0 : i32
    %c0_i32_1 = arith.constant 0 : i32
    return %c0_i32, %c0_i32_0 : i32, i32
  }
  func.func @transform_3(%arg0: i32) -> (i32, i32) {
    %c0_i32 = arith.constant 0 : i32
    %c0_i32_0 = arith.constant 0 : i32
    %c0_i32_1 = arith.constant 0 : i32
    return %c0_i32, %c0_i32_0 : i32, i32
  }
  func.func @transform_4(%arg0: i32) -> (i32, i32) {
    %c0_i32 = arith.constant 0 : i32
    %c0_i32_0 = arith.constant 0 : i32
    %c0_i32_1 = arith.constant 0 : i32
    return %c0_i32, %c0_i32_0 : i32, i32
  }
  func.func @transform_5(%arg0: i32) -> (i32, i32) {
    %c0_i32 = arith.constant 0 : i32
    %c0_i32_0 = arith.constant 0 : i32
    %c0_i32_1 = arith.constant 0 : i32
    return %c0_i32, %c0_i32_0 : i32, i32
  }
  func.func @transform_6(%arg0: i32) -> (i32, i32) {
    %c0_i32 = arith.constant 0 : i32
    %c0_i32_0 = arith.constant 0 : i32
    %c0_i32_1 = arith.constant 0 : i32
    return %c0_i32, %c0_i32_0 : i32, i32
  }
  func.func @transform_7(%arg0: i32) -> (i32, i32) {
    %c0_i32 = arith.constant 0 : i32
    %c0_i32_0 = arith.constant 0 : i32
    return %arg0, %c0_i32 : i32, i32
  }
}

</mosaic_0001>

<llo_original>
// kernel: tpu_custom_call.1
$region0: #{tpu_custom_call.1}
  #allocation0 [shape = 'u32[]', space=smem, size = 0x4, offset = 0x4, fixed_abs, tag = 'smem constant byte address 0x4 - core index']
  #allocation1 [shape = 'u32[144,128]{1,0:T(1,128)}', space=vmem, size = 0x12000, scoped, tag = 'internal scratch']
  %s0 = inlined_call_operand.vmem [shape: bf16[512,64], index: 0, kind: input, shape index: {}]
  %s1 = inlined_call_operand.vmem [shape: bf16[64,128], index: 1, kind: input, shape index: {}]
  %s2 = inlined_call_operand.vmem [shape: f32[1,128], index: 2, kind: input, shape index: {}]
  %s3 = inlined_call_operand.vmem [shape: bf16[128,128], index: 3, kind: input, shape index: {}]
  %s4 = inlined_call_operand.vmem [shape: f32[1,128], index: 4, kind: input, shape index: {}]
  %s5 = inlined_call_operand.vmem [shape: bf16[128,128], index: 5, kind: input, shape index: {}]
  %s6 = inlined_call_operand.vmem [shape: f32[1,128], index: 6, kind: input, shape index: {}]
  %s7 = inlined_call_operand.hbm [shape: f32[512,128], index: 7, kind: output, shape index: {}]
  %s8 = sld [smem:[#allocation0]]
  $region61: #{tpu_custom_call.1} parent=0
    _
  %s10 = ssub.s32 1, %s8
  %s11 = scalar_select 0, %s10, %s8
  $region1: #{tpu_custom_call.1} parent=0
    #allocation2 [shape = 'u8[131072]{0}', space=vmem, size = 0x20000, scoped, tag = 'output window, operand 0']
    #allocation3 [shape = 's32[2]{0}', space=sflag, size = 0x8, scoped, tag = 'scoped memory for tpu_custom_call.1']
    %12 = vsyncpa [#allocation3], 0
    %s13 = scalar_lea.sflag [#allocation3], 1
    %14 = vsyncpa %s13, 0
    loop: start=0, step=1, limit=6
    $region2: #{tpu_custom_call.1} parent=1 // loop_pre_header
      _
    $region3: #{tpu_custom_call.1} parent=1 // loop_header
      %s16 = sphi 0, %s20
      %p17 = scmp.ge.s32.totalorder %s16, 6
      %s26 = sphi 0, %s28
      %s29 = sphi 0, %s26
      %s30 = sphi 0, %s29
      %s46 = sphi 0, %s30
      %s50 = sphi 0, %s50
      %s52 = sphi 0, %s50
      %s53 = sphi 0, %s52
      %s67 = sphi 0, %s53
      %s71 = sphi 0, %s71
      %s73 = sphi 0, %s71
      %s74 = sphi 0, %s73
      %s88 = sphi 0, %s74
      %s92 = sphi 0, %s92
      %s94 = sphi 0, %s92
      %s95 = sphi 0, %s94
      %s109 = sphi 0, %s95
      %s113 = sphi 0, %s113
      %s115 = sphi 0, %s113
      %s116 = sphi 0, %s115
      %s130 = sphi 0, %s116
      %s134 = sphi 0, %s134
      %s136 = sphi 0, %s134
      %s137 = sphi 0, %s136
      %s151 = sphi 0, %s137
      %s155 = sphi 0, %s155
      %s157 = sphi 0, %s155
      %s158 = sphi 0, %s157
      %s172 = sphi 0, %s158
      %s178 = sphi 0, %s180
      %s181 = sphi 0, %s178
      %s182 = sphi 0, %s181
      %s198 = sphi 0, %s182
    $region4: #{tpu_custom_call.1} parent=1 // loop_header_branch
      %19 = sbr.rel (%p17) target = $region8
    $region5: #{tpu_custom_call.1} parent=1 // loop_body
      %s21 = ssub.s32 %s16, 1
      %s22 = ssub.s32 %s16, 2
      %s23 = sadd.s32 %s16, 1
      %s24 = ssub.s32 %s16, %s23
      %p25 = scmp.eq.s32.totalorder %s24, 0
      %s27 = sadd.s32 %s26, 1
      %s28 = scalar_select %p25, %s26, %s27
      %p31 = pneg %p25
      %p32 = scmp.eq.s32.totalorder %s16, 3
      %p33 = por %p31, %p32
      %p34 = scmp.ne.s32.totalorder %s26, %s29
      %p35 = scmp.eq.s32.totalorder %s16, 0
      %p36 = por %p34, %p35
      %p37 = scmp.ne.s32.totalorder %s26, %s29
      %p38 = scmp.eq.s32.totalorder %s21, 3
      %p39 = por %p37, %p38
      %p40 = scmp.ne.s32.totalorder %s29, %s30
      %p41 = scmp.eq.s32.totalorder %s21, 0
      %p42 = por %p40, %p41
      %p43 = scmp.ne.s32.totalorder %s29, %s30
      %p44 = scmp.eq.s32.totalorder %s22, 3
      %p45 = por %p43, %p44
      %p47 = scmp.ne.s32.totalorder %s30, %s46
      %p48 = scmp.eq.s32.totalorder %s22, 0
      %p49 = por %p47, %p48
      %s51 = sadd.s32 %s50, 1
      %p54 = scmp.eq.s32.totalorder %s16, 3
      %p55 = scmp.ne.s32.totalorder %s50, %s52
      %p56 = scmp.eq.s32.totalorder %s16, 0
      %p57 = por %p55, %p56
      %p58 = scmp.ne.s32.totalorder %s50, %s52
      %p59 = scmp.eq.s32.totalorder %s21, 3
      %p60 = por %p58, %p59
      %p61 = scmp.ne.s32.totalorder %s52, %s53
      %p62 = scmp.eq.s32.totalorder %s21, 0
      %p63 = por %p61, %p62
      %p64 = scmp.ne.s32.totalorder %s52, %s53
      %p65 = scmp.eq.s32.totalorder %s22, 3
      %p66 = por %p64, %p65
      %p68 = scmp.ne.s32.totalorder %s53, %s67
      %p69 = scmp.eq.s32.totalorder %s22, 0
      %p70 = por %p68, %p69
      %s72 = sadd.s32 %s71, 1
      %p75 = scmp.eq.s32.totalorder %s16, 3
      %p76 = scmp.ne.s32.totalorder %s71, %s73
      %p77 = scmp.eq.s32.totalorder %s16, 0
      %p78 = por %p76, %p77
      %p79 = scmp.ne.s32.totalorder %s71, %s73
      %p80 = scmp.eq.s32.totalorder %s21, 3
      %p81 = por %p79, %p80
      %p82 = scmp.ne.s32.totalorder %s73, %s74
      %p83 = scmp.eq.s32.totalorder %s21, 0
      %p84 = por %p82, %p83
      %p85 = scmp.ne.s32.totalorder %s73, %s74
      %p86 = scmp.eq.s32.totalorder %s22, 3
      %p87 = por %p85, %p86
      %p89 = scmp.ne.s32.totalorder %s74, %s88
      %p90 = scmp.eq.s32.totalorder %s22, 0
      %p91 = por %p89, %p90
      %s93 = sadd.s32 %s92, 1
      %p96 = scmp.eq.s32.totalorder %s16, 3
      %p97 = scmp.ne.s32.totalorder %s92, %s94
      %p98 = scmp.eq.s32.totalorder %s16, 0
      %p99 = por %p97, %p98
      %p100 = scmp.ne.s32.totalorder %s92, %s94
      %p101 = scmp.eq.s32.totalorder %s21, 3
      %p102 = por %p100, %p101
      %p103 = scmp.ne.s32.totalorder %s94, %s95
      %p104 = scmp.eq.s32.totalorder %s21, 0
      %p105 = por %p103, %p104
      %p106 = scmp.ne.s32.totalorder %s94, %s95
      %p107 = scmp.eq.s32.totalorder %s22, 3
      %p108 = por %p106, %p107
      %p110 = scmp.ne.s32.totalorder %s95, %s109
      %p111 = scmp.eq.s32.totalorder %s22, 0
      %p112 = por %p110, %p111
      %s114 = sadd.s32 %s113, 1
      %p117 = scmp.eq.s32.totalorder %s16, 3
      %p118 = scmp.ne.s32.totalorder %s113, %s115
      %p119 = scmp.eq.s32.totalorder %s16, 0
      %p120 = por %p118, %p119
      %p121 = scmp.ne.s32.totalorder %s113, %s115
      %p122 = scmp.eq.s32.totalorder %s21, 3
      %p123 = por %p121, %p122
      %p124 = scmp.ne.s32.totalorder %s115, %s116
      %p125 = scmp.eq.s32.totalorder %s21, 0
      %p126 = por %p124, %p125
      %p127 = scmp.ne.s32.totalorder %s115, %s116
      %p128 = scmp.eq.s32.totalorder %s22, 3
      %p129 = por %p127, %p128
      %p131 = scmp.ne.s32.totalorder %s116, %s130
      %p132 = scmp.eq.s32.totalorder %s22, 0
      %p133 = por %p131, %p132
      %s135 = sadd.s32 %s134, 1
      %p138 = scmp.eq.s32.totalorder %s16, 3
      %p139 = scmp.ne.s32.totalorder %s134, %s136
      %p140 = scmp.eq.s32.totalorder %s16, 0
      %p141 = por %p139, %p140
      %p142 = scmp.ne.s32.totalorder %s134, %s136
      %p143 = scmp.eq.s32.totalorder %s21, 3
      %p144 = por %p142, %p143
      %p145 = scmp.ne.s32.totalorder %s136, %s137
      %p146 = scmp.eq.s32.totalorder %s21, 0
      %p147 = por %p145, %p146
      %p148 = scmp.ne.s32.totalorder %s136, %s137
      %p149 = scmp.eq.s32.totalorder %s22, 3
      %p150 = por %p148, %p149
      %p152 = scmp.ne.s32.totalorder %s137, %s151
      %p153 = scmp.eq.s32.totalorder %s22, 0
      %p154 = por %p152, %p153
      %s156 = sadd.s32 %s155, 1
      %p159 = scmp.eq.s32.totalorder %s16, 3
      %p160 = scmp.ne.s32.totalorder %s155, %s157
      %p161 = scmp.eq.s32.totalorder %s16, 0
      %p162 = por %p160, %p161
      %p163 = scmp.ne.s32.totalorder %s155, %s157
      %p164 = scmp.eq.s32.totalorder %s21, 3
      %p165 = por %p163, %p164
      %p166 = scmp.ne.s32.totalorder %s157, %s158
      %p167 = scmp.eq.s32.totalorder %s21, 0
      %p168 = por %p166, %p167
      %p169 = scmp.ne.s32.totalorder %s157, %s158
      %p170 = scmp.eq.s32.totalorder %s22, 3
      %p171 = por %p169, %p170
      %p173 = scmp.ne.s32.totalorder %s158, %s172
      %p174 = scmp.eq.s32.totalorder %s22, 0
      %p175 = por %p173, %p174
      %s176 = ssub.s32 %s16, %s23
      %p177 = scmp.eq.s32.totalorder %s176, 0
      %s179 = sadd.s32 %s178, 1
      %s180 = scalar_select %p177, %s178, %s179
      %p183 = pneg %p177
      %p184 = scmp.eq.s32.totalorder %s16, 3
      %p185 = por %p183, %p184
      %p186 = scmp.ne.s32.totalorder %s178, %s181
      %p187 = scmp.eq.s32.totalorder %s16, 0
      %p188 = por %p186, %p187
      %p189 = scmp.ne.s32.totalorder %s178, %s181
      %p190 = scmp.eq.s32.totalorder %s21, 3
      %p191 = por %p189, %p190
      %p192 = scmp.ne.s32.totalorder %s181, %s182
      %p193 = scmp.eq.s32.totalorder %s21, 0
      %p194 = por %p192, %p193
      %p195 = scmp.ne.s32.totalorder %s181, %s182
      %p196 = scmp.eq.s32.totalorder %s22, 3
      %p197 = por %p195, %p196
      %p199 = scmp.ne.s32.totalorder %s182, %s198
      %p200 = scmp.eq.s32.totalorder %s22, 0
      %p201 = por %p199, %p200
      %p202 = scmp.le.s32.totalorder 1, %s16
      %p203 = scmp.lt.s32.totalorder %s16, 5
      %p204 = pnand %p202, %p203
      %p205 = pneg %p204
      // Predicated region
      $region9: #{tpu_custom_call.1} parent=5 // pred_check
        _
      $region10: #{tpu_custom_call.1} parent=5 // pred_check_branch
        %207 = sbr.rel (%p204) target = $region12
      $region11: #{tpu_custom_call.1} parent=5 // pred_region
        %s208 = ssub.s32 %s16, 1
        // Predicated region
        $region13: #{tpu_custom_call.1} parent=11 // pred_check
          %p209 = pneg %p63
        $region14: #{tpu_custom_call.1} parent=11 // pred_check_branch
          %211 = sbr.rel (%p209) target = $region16
        $region15: #{tpu_custom_call.1} parent=11 // pred_region
          _
        $region16: #{tpu_custom_call.1} parent=11 // pred_fallthru
          _
        // Predicated region
        $region17: #{tpu_custom_call.1} parent=11 // pred_check
          %p212 = pneg %p84
        $region18: #{tpu_custom_call.1} parent=11 // pred_check_branch
          %214 = sbr.rel (%p212) target = $region20
        $region19: #{tpu_custom_call.1} parent=11 // pred_region
          _
        $region20: #{tpu_custom_call.1} parent=11 // pred_fallthru
          _
        // Predicated region
        $region21: #{tpu_custom_call.1} parent=11 // pred_check
          %p215 = pneg %p105
        $region22: #{tpu_custom_call.1} parent=11 // pred_check_branch
          %217 = sbr.rel (%p215) target = $region24
        $region23: #{tpu_custom_call.1} parent=11 // pred_region
          _
        $region24: #{tpu_custom_call.1} parent=11 // pred_fallthru
          _
        // Predicated region
        $region25: #{tpu_custom_call.1} parent=11 // pred_check
          %p218 = pneg %p126
        $region26: #{tpu_custom_call.1} parent=11 // pred_check_branch
          %220 = sbr.rel (%p218) target = $region28
        $region27: #{tpu_custom_call.1} parent=11 // pred_region
          _
        $region28: #{tpu_custom_call.1} parent=11 // pred_fallthru
          _
        // Predicated region
        $region29: #{tpu_custom_call.1} parent=11 // pred_check
          %p221 = pneg %p147
        $region30: #{tpu_custom_call.1} parent=11 // pred_check_branch
          %223 = sbr.rel (%p221) target = $region32
        $region31: #{tpu_custom_call.1} parent=11 // pred_region
          _
        $region32: #{tpu_custom_call.1} parent=11 // pred_fallthru
          _
        // Predicated region
        $region33: #{tpu_custom_call.1} parent=11 // pred_check
          %p224 = pneg %p168
        $region34: #{tpu_custom_call.1} parent=11 // pred_check_branch
          %226 = sbr.rel (%p224) target = $region36
        $region35: #{tpu_custom_call.1} parent=11 // pred_region
          _
        $region36: #{tpu_custom_call.1} parent=11 // pred_fallthru
          _
      $region12: #{tpu_custom_call.1} parent=5 // pred_fallthru
        _
      %p227 = scmp.lt.s32.totalorder %s16, 4
      // Predicated region
      $region37: #{tpu_custom_call.1} parent=5 // pred_check
        %p228 = pneg %p227
      $region38: #{tpu_custom_call.1} parent=5 // pred_check_branch
        %230 = sbr.rel (%p228) target = $region40
      $region39: #{tpu_custom_call.1} parent=5 // pred_region
        // Predicated region
        $region41: #{tpu_custom_call.1} parent=39 // pred_check
          %p231 = pneg %p36
        $region42: #{tpu_custom_call.1} parent=39 // pred_check_branch
          %233 = sbr.rel (%p231) target = $region44
        $region43: #{tpu_custom_call.1} parent=39 // pred_region
          %s234 = smul.u32 16, %s16
          %p235 = scmp.lt.s32.totalorder %s234, 63
          %s236 = scalar_select %p235, %s234, 63
          %s237 = smul.addr %s236, 4
          %s238 = scalar_lea.vmem %s0, %s237
          %s239 = smul.u32 16, %s16
        $region44: #{tpu_custom_call.1} parent=39 // pred_fallthru
          _
      $region40: #{tpu_custom_call.1} parent=5 // pred_fallthru
        _
      %p240 = scmp.le.s32.totalorder 1, %s16
      %p241 = scmp.lt.s32.totalorder %s16, 5
      %p242 = pnand %p240, %p241
      %p243 = pneg %p242
      // Predicated region
      $region45: #{tpu_custom_call.1} parent=5 // pred_check
        _
      $region46: #{tpu_custom_call.1} parent=5 // pred_check_branch
        %245 = sbr.rel (%p242) target = $region48
      $region47: #{tpu_custom_call.1} parent=5 // pred_region
        %s246 = ssub.s32 %s16, 1
        %s247 = smul.u32 16, %s21
        %p248 = scmp.lt.s32.totalorder %s247, 63
        %s249 = scalar_select %p248, %s247, 63
        %s250 = smul.addr %s249, 4
        %s251 = scalar_lea.vmem %s0, %s250
        %p252 = pneg %p42
        %p253 = pneg %p39
        %p254 = pneg %p63
        %p255 = pneg %p60
        %p256 = pneg %p84
        %p257 = pneg %p81
        %p258 = pneg %p105
        %p259 = pneg %p102
        %p260 = pneg %p126
        %p261 = pneg %p123
        %p262 = pneg %p147
        %p263 = pneg %p144
        %p264 = pneg %p168
        %p265 = pneg %p165
        %p266 = pneg %p194
        %p267 = pneg %p191
        %s268 = sand.u32 %s181, 1
        %s269 = scalar_lea.sflag [#allocation3], %s268
        %s270 = sand.u32 %s181, 1
        %s271 = smul.addr %s270, 128
        %s272 = scalar_lea.vmem [#allocation2], %s271
        %s273 = smul.u32 16, %s21
        %p274 = scmp.lt.s32.totalorder %s273, 63
        %s275 = scalar_select %p274, %s273, 63
        %s276 = smul.addr %s275, 4
        %s277 = scalar_lea.vmem %s0, %s276
        %s278 = smul.u32 16, %s21
        %s279 = smul.u32 16, %s21
        %v281 = vld [vmem:[%s277] sm:$0xf]
        %v282 = vld [vmem:[%s277 + $0x4] sm:$0xf]
        %v283 = vld [vmem:[%s277 + $0x8] sm:$0xf]
        %v284 = vld [vmem:[%s277 + $0xc] sm:$0xf]
        %v285 = vld [vmem:[%s277 + $0x10] sm:$0xf]
        %v286 = vld [vmem:[%s277 + $0x14] sm:$0xf]
        %v287 = vld [vmem:[%s277 + $0x18] sm:$0xf]
        %v288 = vld [vmem:[%s277 + $0x1c] sm:$0xf]
        %v289 = vld [vmem:[%s277 + $0x20] sm:$0xf]
        %v290 = vld [vmem:[%s277 + $0x24] sm:$0xf]
        %v291 = vld [vmem:[%s277 + $0x28] sm:$0xf]
        %v292 = vld [vmem:[%s277 + $0x2c] sm:$0xf]
        %v293 = vld [vmem:[%s277 + $0x30] sm:$0xf]
        %v294 = vld [vmem:[%s277 + $0x34] sm:$0xf]
        %v295 = vld [vmem:[%s277 + $0x38] sm:$0xf]
        %v296 = vld [vmem:[%s277 + $0x3c] sm:$0xf]
        %v297 = vld [vmem:[%s1] sm:$0xf]
        %v298 = vld [vmem:[%s1 + $0x4] sm:$0xf]
        %v299 = vld [vmem:[%s1 + $0x8] sm:$0xf]
        %v300 = vld [vmem:[%s1 + $0xc] sm:$0xf]
        %v301 = vld [vmem:[%s1 + $0x10] sm:$0xf]
        %v302 = vld [vmem:[%s1 + $0x14] sm:$0xf]
        %v303 = vld [vmem:[%s1 + $0x18] sm:$0xf]
        %v304 = vld [vmem:[%s1 + $0x1c] sm:$0xf]
        %v305 = vld [vmem:[%s2] sm:$0x1]
        %v307 = vlaneseq
        %v308 = vshrl.u32 %v307, 7
        %v309 = vsub.s32 0, %v308
        %v310 = vrot.slane %v305, %v309
        %v328 = vunpack.c.l.b16 %v281
        %v329 = vunpack.c.l.b16 %v282
        %v330 = vunpack.c.l.b16 %v283
        %v331 = vunpack.c.l.b16 %v284
        %v332 = vunpack.c.l.b16 %v285
        %v333 = vunpack.c.l.b16 %v286
        %v334 = vunpack.c.l.b16 %v287
        %v335 = vunpack.c.l.b16 %v288
        %v336 = vunpack.c.l.b16 %v289
        %v337 = vunpack.c.l.b16 %v290
        %v338 = vunpack.c.l.b16 %v291
        %v339 = vunpack.c.l.b16 %v292
        %v340 = vunpack.c.l.b16 %v293
        %v341 = vunpack.c.l.b16 %v294
        %v342 = vunpack.c.l.b16 %v295
        %v343 = vunpack.c.l.b16 %v296
        %v344 = vpack.c.b16 %v329, %v328
        %v345 = vpack.c.b16 %v331, %v330
        %v346 = vpack.c.b16 %v333, %v332
        %v347 = vpack.c.b16 %v335, %v334
        %v348 = vpack.c.b16 %v337, %v336
        %v349 = vpack.c.b16 %v339, %v338
        %v350 = vpack.c.b16 %v341, %v340
        %v351 = vpack.c.b16 %v343, %v342
        %v360 = vunpack.c.l.b16 %v297
        %v361 = vunpack.c.l.b16 %v298
        %v362 = vunpack.c.l.b16 %v299
        %v363 = vunpack.c.l.b16 %v300
        %v364 = vunpack.c.l.b16 %v301
        %v365 = vunpack.c.l.b16 %v302
        %v366 = vunpack.c.l.b16 %v303
        %v367 = vunpack.c.l.b16 %v304
        %v368 = vpack.c.b16 %v361, %v360
        %v369 = vpack.c.b16 %v363, %v362
        %v370 = vpack.c.b16 %v365, %v364
        %v371 = vpack.c.b16 %v367, %v366
        %vm376 = vcmask 523264
        %v378 = vsel %vm376, %v344, 0
        %v381 = vsel %vm376, %v345, 0
        %v384 = vsel %vm376, %v346, 0
        %v387 = vsel %vm376, %v347, 0
        %v390 = vsel %vm376, %v348, 0
        %v393 = vsel %vm376, %v349, 0
        %v396 = vsel %vm376, %v350, 0
        %v399 = vsel %vm376, %v351, 0
        %401 = vmatprep.subr.bf16.mxu0 0
        %402 = vmatpush1.bf16.msra.mxu0 0
        %403 = vmatprep.subr.bf16.mxu0 0
        %404 = vmatpush1.bf16.msra.mxu0 0
        %405 = vmatprep.subr.bf16.mxu0 0
        %406 = vmatpush1.bf16.msra.mxu0 0
        %407 = vmatprep.subr.bf16.mxu0 0
        %408 = vmatpush1.bf16.msra.mxu0 0
        %409 = vmatprep.subr.bf16.mxu0 0
        %410 = vmatpush1.bf16.msra.mxu0 %v371
        %411 = vmatprep.subr.bf16.mxu0 0
        %412 = vmatpush1.bf16.msra.mxu0 %v370
        %413 = vmatprep.subr.bf16.mxu0 0
        %414 = vmatpush1.bf16.msra.mxu0 %v369
        %415 = vmatprep.subr.bf16.mxu0 0
        %416 = vmatpush1.bf16.msra.mxu0 %v368
        %417 = vmatprep.subr.bf16.mxu0 0
        %418 = vmatpush2.bf16.msra.mxu0 0
        %419 = vmatprep.subr.bf16.mxu0 0
        %420 = vmatpush2.bf16.msra.mxu0 0
        %421 = vmatprep.subr.bf16.mxu0 0
        %422 = vmatpush2.bf16.msra.mxu0 0
        %423 = vmatprep.subr.bf16.mxu0 0
        %424 = vmatpush2.bf16.msra.mxu0 0
        %425 = vmatprep.subr.bf16.mxu0 0
        %426 = vmatpush2.bf16.msra.mxu0 0
        %427 = vmatprep.subr.bf16.mxu0 0
        %428 = vmatpush2.bf16.msra.mxu0 0
        %429 = vmatprep.subr.bf16.mxu0 0
        %430 = vmatpush2.bf16.msra.mxu0 0
        %431 = vmatprep.subr.bf16.mxu0 0
        %432 = vmatpush2.bf16.msra.mxu0 0
        %433 = vmatprep.mubr.bf16.mxu0 0
        %434 = vmatmul.mubr.bf16.gmra.mxu0 %v378
        %v435 = vpop.f32.mrf.mxu0
        %v436 = vadd.f32 %v310, %v435
        %v437 = vpop.f32.mrf.mxu0
        %v438 = vpop.f32.mrf.mxu0
        %v439 = vadd.f32 %v310, %v438
        %v440 = vpop.f32.mrf.mxu0
        %441 = vmatprep.mubr.bf16.mxu0 0
        %442 = vmatmul.mubr.bf16.gmra.mxu0 %v381
        %v443 = vpop.f32.mrf.mxu0
        %v444 = vadd.f32 %v310, %v443
        %v445 = vpop.f32.mrf.mxu0
        %v446 = vpop.f32.mrf.mxu0
        %v447 = vadd.f32 %v310, %v446
        %v448 = vpop.f32.mrf.mxu0
        %449 = vmatprep.mubr.bf16.mxu0 0
        %450 = vmatmul.mubr.bf16.gmra.mxu0 %v384
        %v451 = vpop.f32.mrf.mxu0
        %v452 = vadd.f32 %v310, %v451
        %v453 = vpop.f32.mrf.mxu0
        %v454 = vpop.f32.mrf.mxu0
        %v455 = vadd.f32 %v310, %v454
        %v456 = vpop.f32.mrf.mxu0
        %457 = vmatprep.mubr.bf16.mxu0 0
        %458 = vmatmul.mubr.bf16.gmra.mxu0 %v387
        %v459 = vpop.f32.mrf.mxu0
        %v460 = vadd.f32 %v310, %v459
        %v461 = vpop.f32.mrf.mxu0
        %v462 = vpop.f32.mrf.mxu0
        %v463 = vadd.f32 %v310, %v462
        %v464 = vpop.f32.mrf.mxu0
        %465 = vmatprep.mubr.bf16.mxu0 0
        %466 = vmatmul.mubr.bf16.gmra.mxu0 %v390
        %v467 = vpop.f32.mrf.mxu0
        %v468 = vadd.f32 %v310, %v467
        %v469 = vpop.f32.mrf.mxu0
        %v470 = vpop.f32.mrf.mxu0
        %v471 = vadd.f32 %v310, %v470
        %v472 = vpop.f32.mrf.mxu0
        %473 = vmatprep.mubr.bf16.mxu0 0
        %474 = vmatmul.mubr.bf16.gmra.mxu0 %v393
        %v475 = vpop.f32.mrf.mxu0
        %v476 = vadd.f32 %v310, %v475
        %v477 = vpop.f32.mrf.mxu0
        %v478 = vpop.f32.mrf.mxu0
        %v479 = vadd.f32 %v310, %v478
        %v480 = vpop.f32.mrf.mxu0
        %481 = vmatprep.mubr.bf16.mxu0 0
        %482 = vmatmul.mubr.bf16.gmra.mxu0 %v396
        %v483 = vpop.f32.mrf.mxu0
        %v484 = vadd.f32 %v310, %v483
        %v485 = vpop.f32.mrf.mxu0
        %v486 = vpop.f32.mrf.mxu0
        %v487 = vadd.f32 %v310, %v486
        %v488 = vpop.f32.mrf.mxu0
        %489 = vmatprep.mubr.bf16.mxu0 0
        %490 = vmatmul.mubr.bf16.gmra.mxu0 %v399
        %v491 = vpop.f32.mrf.mxu0
        %v492 = vadd.f32 %v310, %v491
        %v493 = vpop.f32.mrf.mxu0
        %v494 = vpop.f32.mrf.mxu0
        %v495 = vadd.f32 %v310, %v494
        %v496 = vpop.f32.mrf.mxu0
        %497 = vdwg.mxu0
        %v498 = vmax.f32 %v436, 0.0
        %v499 = vmax.f32 %v439, 0.0
        %v500 = vmax.f32 %v444, 0.0
        %v501 = vmax.f32 %v447, 0.0
        %v502 = vmax.f32 %v452, 0.0
        %v503 = vmax.f32 %v455, 0.0
        %v504 = vmax.f32 %v460, 0.0
        %v505 = vmax.f32 %v463, 0.0
        %v506 = vmax.f32 %v468, 0.0
        %v507 = vmax.f32 %v471, 0.0
        %v508 = vmax.f32 %v476, 0.0
        %v509 = vmax.f32 %v479, 0.0
        %v510 = vmax.f32 %v484, 0.0
        %v511 = vmax.f32 %v487, 0.0
        %v512 = vmax.f32 %v492, 0.0
        %v513 = vmax.f32 %v495, 0.0
        %v514 = vpack.c.bf16 %v499, %v498
        %v515 = vpack.c.bf16 %v501, %v500
        %v516 = vpack.c.bf16 %v503, %v502
        %v517 = vpack.c.bf16 %v505, %v504
        %v518 = vpack.c.bf16 %v507, %v506
        %v519 = vpack.c.bf16 %v509, %v508
        %v520 = vpack.c.bf16 %v511, %v510
        %v521 = vpack.c.bf16 %v513, %v512
        %v522 = vld [vmem:[%s3] sm:$0xf]
        %v523 = vld [vmem:[%s3 + $0x4] sm:$0xf]
        %v524 = vld [vmem:[%s3 + $0x8] sm:$0xf]
        %v525 = vld [vmem:[%s3 + $0xc] sm:$0xf]
        %v526 = vld [vmem:[%s3 + $0x10] sm:$0xf]
        %v527 = vld [vmem:[%s3 + $0x14] sm:$0xf]
        %v528 = vld [vmem:[%s3 + $0x18] sm:$0xf]
        %v529 = vld [vmem:[%s3 + $0x1c] sm:$0xf]
        %v530 = vld [vmem:[%s3 + $0x20] sm:$0xf]
        %v531 = vld [vmem:[%s3 + $0x24] sm:$0xf]
        %v532 = vld [vmem:[%s3 + $0x28] sm:$0xf]
        %v533 = vld [vmem:[%s3 + $0x2c] sm:$0xf]
        %v534 = vld [vmem:[%s3 + $0x30] sm:$0xf]
        %v535 = vld [vmem:[%s3 + $0x34] sm:$0xf]
        %v536 = vld [vmem:[%s3 + $0x38] sm:$0xf]
        %v537 = vld [vmem:[%s3 + $0x3c] sm:$0xf]
        %v538 = vld [vmem:[%s4] sm:$0x1]
        %v540 = vlaneseq
        %v541 = vshrl.u32 %v540, 7
        %v542 = vsub.s32 0, %v541
        %v543 = vrot.slane %v538, %v542
        %v561 = vunpack.c.l.b16 %v522
        %v562 = vunpack.c.l.b16 %v523
        %v563 = vunpack.c.l.b16 %v524
        %v564 = vunpack.c.l.b16 %v525
        %v565 = vunpack.c.l.b16 %v526
        %v566 = vunpack.c.l.b16 %v527
        %v567 = vunpack.c.l.b16 %v528
        %v568 = vunpack.c.l.b16 %v529
        %v569 = vunpack.c.l.b16 %v530
        %v570 = vunpack.c.l.b16 %v531
        %v571 = vunpack.c.l.b16 %v532
        %v572 = vunpack.c.l.b16 %v533
        %v573 = vunpack.c.l.b16 %v534
        %v574 = vunpack.c.l.b16 %v535
        %v575 = vunpack.c.l.b16 %v536
        %v576 = vunpack.c.l.b16 %v537
        %v577 = vpack.c.b16 %v562, %v561
        %v578 = vpack.c.b16 %v564, %v563
        %v579 = vpack.c.b16 %v566, %v565
        %v580 = vpack.c.b16 %v568, %v567
        %v581 = vpack.c.b16 %v570, %v569
        %v582 = vpack.c.b16 %v572, %v571
        %v583 = vpack.c.b16 %v574, %v573
        %v584 = vpack.c.b16 %v576, %v575
        %593 = vmatprep.subr.bf16.mxu0 0
        %594 = vmatpush1.bf16.msra.mxu0 %v584
        %595 = vmatprep.subr.bf16.mxu0 0
        %596 = vmatpush1.bf16.msra.mxu0 %v583
        %597 = vmatprep.subr.bf16.mxu0 0
        %598 = vmatpush1.bf16.msra.mxu0 %v582
        %599 = vmatprep.subr.bf16.mxu0 0
        %600 = vmatpush1.bf16.msra.mxu0 %v581
        %601 = vmatprep.subr.bf16.mxu0 0
        %602 = vmatpush1.bf16.msra.mxu0 %v580
        %603 = vmatprep.subr.bf16.mxu0 0
        %604 = vmatpush1.bf16.msra.mxu0 %v579
        %605 = vmatprep.subr.bf16.mxu0 0
        %606 = vmatpush1.bf16.msra.mxu0 %v578
        %607 = vmatprep.subr.bf16.mxu0 0
        %608 = vmatpush1.bf16.msra.mxu0 %v577
        %609 = vmatprep.subr.bf16.mxu0 0
        %610 = vmatpush2.bf16.msra.mxu0 0
        %611 = vmatprep.subr.bf16.mxu0 0
        %612 = vmatpush2.bf16.msra.mxu0 0
        %613 = vmatprep.subr.bf16.mxu0 0
        %614 = vmatpush2.bf16.msra.mxu0 0
        %615 = vmatprep.subr.bf16.mxu0 0
        %616 = vmatpush2.bf16.msra.mxu0 0
        %617 = vmatprep.subr.bf16.mxu0 0
        %618 = vmatpush2.bf16.msra.mxu0 0
        %619 = vmatprep.subr.bf16.mxu0 0
        %620 = vmatpush2.bf16.msra.mxu0 0
        %621 = vmatprep.subr.bf16.mxu0 0
        %622 = vmatpush2.bf16.msra.mxu0 0
        %623 = vmatprep.subr.bf16.mxu0 0
        %624 = vmatpush2.bf16.msra.mxu0 0
        %625 = vmatprep.mubr.bf16.mxu0 0
        %626 = vmatmul.mubr.bf16.gmra.mxu0 %v514
        %v627 = vpop.f32.mrf.mxu0
        %v628 = vadd.f32 %v543, %v627
        %v629 = vpop.f32.mrf.mxu0
        %v630 = vpop.f32.mrf.mxu0
        %v631 = vadd.f32 %v543, %v630
        %v632 = vpop.f32.mrf.mxu0
        %633 = vmatprep.mubr.bf16.mxu0 0
        %634 = vmatmul.mubr.bf16.gmra.mxu0 %v515
        %v635 = vpop.f32.mrf.mxu0
        %v636 = vadd.f32 %v543, %v635
        %v637 = vpop.f32.mrf.mxu0
        %v638 = vpop.f32.mrf.mxu0
        %v639 = vadd.f32 %v543, %v638
        %v640 = vpop.f32.mrf.mxu0
        %641 = vmatprep.mubr.bf16.mxu0 0
        %642 = vmatmul.mubr.bf16.gmra.mxu0 %v516
        %v643 = vpop.f32.mrf.mxu0
        %v644 = vadd.f32 %v543, %v643
        %v645 = vpop.f32.mrf.mxu0
        %v646 = vpop.f32.mrf.mxu0
        %v647 = vadd.f32 %v543, %v646
        %v648 = vpop.f32.mrf.mxu0
        %649 = vmatprep.mubr.bf16.mxu0 0
        %650 = vmatmul.mubr.bf16.gmra.mxu0 %v517
        %v651 = vpop.f32.mrf.mxu0
        %v652 = vadd.f32 %v543, %v651
        %v653 = vpop.f32.mrf.mxu0
        %v654 = vpop.f32.mrf.mxu0
        %v655 = vadd.f32 %v543, %v654
        %v656 = vpop.f32.mrf.mxu0
        %657 = vmatprep.mubr.bf16.mxu0 0
        %658 = vmatmul.mubr.bf16.gmra.mxu0 %v518
        %v659 = vpop.f32.mrf.mxu0
        %v660 = vadd.f32 %v543, %v659
        %v661 = vpop.f32.mrf.mxu0
        %v662 = vpop.f32.mrf.mxu0
        %v663 = vadd.f32 %v543, %v662
        %v664 = vpop.f32.mrf.mxu0
        %665 = vmatprep.mubr.bf16.mxu0 0
        %666 = vmatmul.mubr.bf16.gmra.mxu0 %v519
        %v667 = vpop.f32.mrf.mxu0
        %v668 = vadd.f32 %v543, %v667
        %v669 = vpop.f32.mrf.mxu0
        %v670 = vpop.f32.mrf.mxu0
        %v671 = vadd.f32 %v543, %v670
        %v672 = vpop.f32.mrf.mxu0
        %673 = vmatprep.mubr.bf16.mxu0 0
        %674 = vmatmul.mubr.bf16.gmra.mxu0 %v520
        %v675 = vpop.f32.mrf.mxu0
        %v676 = vadd.f32 %v543, %v675
        %v677 = vpop.f32.mrf.mxu0
        %v678 = vpop.f32.mrf.mxu0
        %v679 = vadd.f32 %v543, %v678
        %v680 = vpop.f32.mrf.mxu0
        %681 = vmatprep.mubr.bf16.mxu0 0
        %682 = vmatmul.mubr.bf16.gmra.mxu0 %v521
        %v683 = vpop.f32.mrf.mxu0
        %v684 = vadd.f32 %v543, %v683
        %v685 = vpop.f32.mrf.mxu0
        %v686 = vpop.f32.mrf.mxu0
        %v687 = vadd.f32 %v543, %v686
        %v688 = vpop.f32.mrf.mxu0
        %689 = vdwg.mxu0
        %v690 = vmax.f32 %v628, 0.0
        %v691 = vmax.f32 %v631, 0.0
        %v692 = vmax.f32 %v636, 0.0
        %v693 = vmax.f32 %v639, 0.0
        %v694 = vmax.f32 %v644, 0.0
        %v695 = vmax.f32 %v647, 0.0
        %v696 = vmax.f32 %v652, 0.0
        %v697 = vmax.f32 %v655, 0.0
        %v698 = vmax.f32 %v660, 0.0
        %v699 = vmax.f32 %v663, 0.0
        %v700 = vmax.f32 %v668, 0.0
        %v701 = vmax.f32 %v671, 0.0
        %v702 = vmax.f32 %v676, 0.0
        %v703 = vmax.f32 %v679, 0.0
        %v704 = vmax.f32 %v684, 0.0
        %v705 = vmax.f32 %v687, 0.0
        %v706 = vpack.c.bf16 %v691, %v690
        %v707 = vpack.c.bf16 %v693, %v692
        %v708 = vpack.c.bf16 %v695, %v694
        %v709 = vpack.c.bf16 %v697, %v696
        %v710 = vpack.c.bf16 %v699, %v698
        %v711 = vpack.c.bf16 %v701, %v700
        %v712 = vpack.c.bf16 %v703, %v702
        %v713 = vpack.c.bf16 %v705, %v704
        %v714 = vld [vmem:[%s5] sm:$0xf]
        %v715 = vld [vmem:[%s5 + $0x4] sm:$0xf]
        %v716 = vld [vmem:[%s5 + $0x8] sm:$0xf]
        %v717 = vld [vmem:[%s5 + $0xc] sm:$0xf]
        %v718 = vld [vmem:[%s5 + $0x10] sm:$0xf]
        %v719 = vld [vmem:[%s5 + $0x14] sm:$0xf]
        %v720 = vld [vmem:[%s5 + $0x18] sm:$0xf]
        %v721 = vld [vmem:[%s5 + $0x1c] sm:$0xf]
        %v722 = vld [vmem:[%s5 + $0x20] sm:$0xf]
        %v723 = vld [vmem:[%s5 + $0x24] sm:$0xf]
        %v724 = vld [vmem:[%s5 + $0x28] sm:$0xf]
        %v725 = vld [vmem:[%s5 + $0x2c] sm:$0xf]
        %v726 = vld [vmem:[%s5 + $0x30] sm:$0xf]
        %v727 = vld [vmem:[%s5 + $0x34] sm:$0xf]
        %v728 = vld [vmem:[%s5 + $0x38] sm:$0xf]
        %v729 = vld [vmem:[%s5 + $0x3c] sm:$0xf]
        %v730 = vld [vmem:[%s6] sm:$0x1]
        %v732 = vlaneseq
        %v733 = vshrl.u32 %v732, 7
        %v734 = vsub.s32 0, %v733
        %v735 = vrot.slane %v730, %v734
        %v753 = vunpack.c.l.b16 %v714
        %v754 = vunpack.c.l.b16 %v715
        %v755 = vunpack.c.l.b16 %v716
        %v756 = vunpack.c.l.b16 %v717
        %v757 = vunpack.c.l.b16 %v718
        %v758 = vunpack.c.l.b16 %v719
        %v759 = vunpack.c.l.b16 %v720
        %v760 = vunpack.c.l.b16 %v721
        %v761 = vunpack.c.l.b16 %v722
        %v762 = vunpack.c.l.b16 %v723
        %v763 = vunpack.c.l.b16 %v724
        %v764 = vunpack.c.l.b16 %v725
        %v765 = vunpack.c.l.b16 %v726
        %v766 = vunpack.c.l.b16 %v727
        %v767 = vunpack.c.l.b16 %v728
        %v768 = vunpack.c.l.b16 %v729
        %v769 = vpack.c.b16 %v754, %v753
        %v770 = vpack.c.b16 %v756, %v755
        %v771 = vpack.c.b16 %v758, %v757
        %v772 = vpack.c.b16 %v760, %v759
        %v773 = vpack.c.b16 %v762, %v761
        %v774 = vpack.c.b16 %v764, %v763
        %v775 = vpack.c.b16 %v766, %v765
        %v776 = vpack.c.b16 %v768, %v767
        %785 = vmatprep.subr.bf16.mxu0 0
        %786 = vmatpush1.bf16.msra.mxu0 %v776
        %787 = vmatprep.subr.bf16.mxu0 0
        %788 = vmatpush1.bf16.msra.mxu0 %v775
        %789 = vmatprep.subr.bf16.mxu0 0
        %790 = vmatpush1.bf16.msra.mxu0 %v774
        %791 = vmatprep.subr.bf16.mxu0 0
        %792 = vmatpush1.bf16.msra.mxu0 %v773
        %793 = vmatprep.subr.bf16.mxu0 0
        %794 = vmatpush1.bf16.msra.mxu0 %v772
        %795 = vmatprep.subr.bf16.mxu0 0
        %796 = vmatpush1.bf16.msra.mxu0 %v771
        %797 = vmatprep.subr.bf16.mxu0 0
        %798 = vmatpush1.bf16.msra.mxu0 %v770
        %799 = vmatprep.subr.bf16.mxu0 0
        %800 = vmatpush1.bf16.msra.mxu0 %v769
        %801 = vmatprep.subr.bf16.mxu0 0
        %802 = vmatpush2.bf16.msra.mxu0 0
        %803 = vmatprep.subr.bf16.mxu0 0
        %804 = vmatpush2.bf16.msra.mxu0 0
        %805 = vmatprep.subr.bf16.mxu0 0
        %806 = vmatpush2.bf16.msra.mxu0 0
        %807 = vmatprep.subr.bf16.mxu0 0
        %808 = vmatpush2.bf16.msra.mxu0 0
        %809 = vmatprep.subr.bf16.mxu0 0
        %810 = vmatpush2.bf16.msra.mxu0 0
        %811 = vmatprep.subr.bf16.mxu0 0
        %812 = vmatpush2.bf16.msra.mxu0 0
        %813 = vmatprep.subr.bf16.mxu0 0
        %814 = vmatpush2.bf16.msra.mxu0 0
        %815 = vmatprep.subr.bf16.mxu0 0
        %816 = vmatpush2.bf16.msra.mxu0 0
        %817 = vmatprep.mubr.bf16.mxu0 0
        %818 = vmatmul.mubr.bf16.gmra.mxu0 %v706
        %v819 = vpop.f32.mrf.mxu0
        %v820 = vadd.f32 %v735, %v819
        %v821 = vpop.f32.mrf.mxu0
        %v822 = vpop.f32.mrf.mxu0
        %v823 = vadd.f32 %v735, %v822
        %v824 = vpop.f32.mrf.mxu0
        %825 = vmatprep.mubr.bf16.mxu0 0
        %826 = vmatmul.mubr.bf16.gmra.mxu0 %v707
        %v827 = vpop.f32.mrf.mxu0
        %v828 = vadd.f32 %v735, %v827
        %v829 = vpop.f32.mrf.mxu0
        %v830 = vpop.f32.mrf.mxu0
        %v831 = vadd.f32 %v735, %v830
        %v832 = vpop.f32.mrf.mxu0
        %833 = vmatprep.mubr.bf16.mxu0 0
        %834 = vmatmul.mubr.bf16.gmra.mxu0 %v708
        %v835 = vpop.f32.mrf.mxu0
        %v836 = vadd.f32 %v735, %v835
        %v837 = vpop.f32.mrf.mxu0
        %v838 = vpop.f32.mrf.mxu0
        %v839 = vadd.f32 %v735, %v838
        %v840 = vpop.f32.mrf.mxu0
        %841 = vmatprep.mubr.bf16.mxu0 0
        %842 = vmatmul.mubr.bf16.gmra.mxu0 %v709
        %v843 = vpop.f32.mrf.mxu0
        %v844 = vadd.f32 %v735, %v843
        %v845 = vpop.f32.mrf.mxu0
        %v846 = vpop.f32.mrf.mxu0
        %v847 = vadd.f32 %v735, %v846
        %v848 = vpop.f32.mrf.mxu0
        %849 = vmatprep.mubr.bf16.mxu0 0
        %850 = vmatmul.mubr.bf16.gmra.mxu0 %v710
        %v851 = vpop.f32.mrf.mxu0
        %v852 = vadd.f32 %v735, %v851
        %v853 = vpop.f32.mrf.mxu0
        %v854 = vpop.f32.mrf.mxu0
        %v855 = vadd.f32 %v735, %v854
        %v856 = vpop.f32.mrf.mxu0
        %857 = vmatprep.mubr.bf16.mxu0 0
        %858 = vmatmul.mubr.bf16.gmra.mxu0 %v711
        %v859 = vpop.f32.mrf.mxu0
        %v860 = vadd.f32 %v735, %v859
        %v861 = vpop.f32.mrf.mxu0
        %v862 = vpop.f32.mrf.mxu0
        %v863 = vadd.f32 %v735, %v862
        %v864 = vpop.f32.mrf.mxu0
        %865 = vmatprep.mubr.bf16.mxu0 0
        %866 = vmatmul.mubr.bf16.gmra.mxu0 %v712
        %v867 = vpop.f32.mrf.mxu0
        %v868 = vadd.f32 %v735, %v867
        %v869 = vpop.f32.mrf.mxu0
        %v870 = vpop.f32.mrf.mxu0
        %v871 = vadd.f32 %v735, %v870
        %v872 = vpop.f32.mrf.mxu0
        %873 = vmatprep.mubr.bf16.mxu0 0
        %874 = vmatmul.mubr.bf16.gmra.mxu0 %v713
        %v875 = vpop.f32.mrf.mxu0
        %v876 = vadd.f32 %v735, %v875
        %v877 = vpop.f32.mrf.mxu0
        %v878 = vpop.f32.mrf.mxu0
        %v879 = vadd.f32 %v735, %v878
        %v880 = vpop.f32.mrf.mxu0
        %881 = vdwg.mxu0
        %882 = vst [vmem:[%s272] sm:$0xff] %v820
        %883 = vst [vmem:[%s272 + $0x8] sm:$0xff] %v823
        %884 = vst [vmem:[%s272 + $0x10] sm:$0xff] %v828
        %885 = vst [vmem:[%s272 + $0x18] sm:$0xff] %v831
        %886 = vst [vmem:[%s272 + $0x20] sm:$0xff] %v836
        %887 = vst [vmem:[%s272 + $0x28] sm:$0xff] %v839
        %888 = vst [vmem:[%s272 + $0x30] sm:$0xff] %v844
        %889 = vst [vmem:[%s272 + $0x38] sm:$0xff] %v847
        %890 = vst [vmem:[%s272 + $0x40] sm:$0xff] %v852
        %891 = vst [vmem:[%s272 + $0x48] sm:$0xff] %v855
        %892 = vst [vmem:[%s272 + $0x50] sm:$0xff] %v860
        %893 = vst [vmem:[%s272 + $0x58] sm:$0xff] %v863
        %894 = vst [vmem:[%s272 + $0x60] sm:$0xff] %v868
        %895 = vst [vmem:[%s272 + $0x68] sm:$0xff] %v871
        %896 = vst [vmem:[%s272 + $0x70] sm:$0xff] %v876
        %897 = vst [vmem:[%s272 + $0x78] sm:$0xff] %v879
        %s898 = sand.u32 %s181, 1
        %s899 = scalar_lea.sflag [#allocation3], %s898
        %s900 = sand.u32 %s181, 1
        %s901 = smul.addr %s900, 128
        %s902 = scalar_lea.vmem [#allocation2], %s901
        // Predicated region
        $region49: #{tpu_custom_call.1} parent=47 // pred_check
          %p903 = pneg %p191
        $region50: #{tpu_custom_call.1} parent=47 // pred_check_branch
          %905 = sbr.rel (%p903) target = $region52
        $region51: #{tpu_custom_call.1} parent=47 // pred_region
          %s906 = smul.u32 16, %s21
          %s908 = ssub.s32 2048, 2048
          %909 = vsyncadd %s899, %s908
          %s910 = smul.addr %s906, 128
          %s911 = scalar_lea.hbm %s7, %s910
          %s912 = sshll.u32 %s902, 4
          %s913 = int_to_ptr.vmem [resolvable:$true] %s912
          %918 = dma.vmem_to_hbm [thread:$0]  %s913, 2048, %s911, %s899, 128, 128, 8
        $region52: #{tpu_custom_call.1} parent=47 // pred_fallthru
          _
      $region48: #{tpu_custom_call.1} parent=5 // pred_fallthru
        _
      %p919 = scmp.le.s32.totalorder 2, %s16
      // Predicated region
      $region53: #{tpu_custom_call.1} parent=5 // pred_check
        %p920 = pneg %p919
      $region54: #{tpu_custom_call.1} parent=5 // pred_check_branch
        %922 = sbr.rel (%p920) target = $region56
      $region55: #{tpu_custom_call.1} parent=5 // pred_region
        %s923 = ssub.s32 %s16, 2
        // Predicated region
        $region57: #{tpu_custom_call.1} parent=55 // pred_check
          %p924 = pneg %p197
        $region58: #{tpu_custom_call.1} parent=55 // pred_check_branch
          %926 = sbr.rel (%p924) target = $region60
        $region59: #{tpu_custom_call.1} parent=55 // pred_region
          %s927 = sand.u32 %s182, 1
          %s928 = scalar_lea.sflag [#allocation3], %s927
          %s929 = sand.u32 %s182, 1
          %s930 = smul.addr %s929, 128
          %s931 = scalar_lea.vmem [#allocation2], %s930
          %932 = dma.done %s928, 2048
        $region60: #{tpu_custom_call.1} parent=55 // pred_fallthru
          _
      $region56: #{tpu_custom_call.1} parent=5 // pred_fallthru
        _
    $region6: #{tpu_custom_call.1} parent=1 // loop_footer
      %s20 = sadd.s32 1, %s16
    $region7: #{tpu_custom_call.1} parent=1 // loop_footer_branch
      %15 = sbr.rel target = $region3
    $region8: #{tpu_custom_call.1} parent=1 // loop_exit
      _
    %933 = vsyncpa [#allocation3], 1
    %s934 = scalar_lea.sflag [#allocation3], 1
    %935 = vsyncpa %s934, 1

</llo_original>
